<compile_context>
chip_gen: v6e
topology: v6e:2x2x1
jax: 0.10.0
libtpu: 0.0.40
codegen_flags: <defaults>
</compile_context>

<pallas_src>
import jax
import jax.numpy as jnp
from jax.experimental import pallas as pl
from jax.experimental.pallas import tpu as pltpu


def _round_up(x, m):
    return ((x + m - 1) // m) * m


# ---------------------------------------------------------------------------
# Kernels
# ---------------------------------------------------------------------------

def _slot_kernel_fused(x_ref, w_ref, b_ref, o_ref):
    # x_ref: [TM, H], w_ref: [H, Np] (resident), b_ref: [1, Np], o_ref: [TM, Np]
    # Single-K fast path: no accumulator scratch, no zero-fill, no acc->out copy.
    o_ref[...] = (
        jnp.dot(x_ref[...], w_ref[...], preferred_element_type=jnp.float32)
        + b_ref[...]
    ).astype(o_ref.dtype)


def _slot_kernel_ktiled(x_ref, w_ref, b_ref, o_ref, acc_ref):
    # Fallback for very large H: x_ref [TM, TK], w_ref [TK, Np], acc f32 [TM, Np].
    k = pl.program_id(1)

    @pl.when(k == 0)
    def _():
        acc_ref[...] = jnp.zeros_like(acc_ref)

    acc_ref[...] += jnp.dot(
        x_ref[...], w_ref[...], preferred_element_type=jnp.float32
    )

    @pl.when(k == pl.num_programs(1) - 1)
    def _():
        # Bias add + cast only in the finalize step.
        o_ref[...] = (acc_ref[...] + b_ref[...]).astype(o_ref.dtype)


# ---------------------------------------------------------------------------
# Tiling / budgeting helpers
# ---------------------------------------------------------------------------

def _vmem_budget():
    """Generation-aware scoped-VMEM limit and the tile budget we size against."""
    phys = 64 * 1024 * 1024  # conservative default (v7x per-TC VMEM)
    try:
        info = pltpu.get_tpu_info()
        phys = getattr(info, "vmem_capacity_bytes", phys)
    except Exception:
        pass
    # v5e/v6e (128 MiB) -> 96 MiB scoped; v7x (64 MiB/TC) -> 48 MiB scoped.
    limit = min((phys * 3) // 4, 100 * 1024 * 1024)
    tile_budget = (limit * 3) // 4  # headroom for compiler-internal scratch
    return limit, tile_budget


def _tile_vmem_bytes(tm, tk, npad, xb, wb, ob, bb, with_acc):
    # Dtype-aware: double-buffered x / w / out tiles + resident bias (+ f32 acc).
    total = 2 * tm * tk * xb
    total += 2 * tk * npad * wb
    total += 2 * tm * npad * ob
    total += 2 * npad * bb
    if with_acc:
        total += tm * npad * 4
    return total


def _shrink(tm, sub):
    return max(sub, ((tm // 2) // sub) * sub)


# ---------------------------------------------------------------------------
# Wrapper
# ---------------------------------------------------------------------------

def prepare_slot_classifier_params(weight, bias):
    """Init-time (once-per-model) parameter prep.

    weight: [N, H] (PyTorch nn.Linear layout), bias: [N].
    Returns (w_padded [H, Np], b_padded [1, Np], N) with Np = round_up(N, 128),
    so no per-forward jnp.pad / transpose of the parameters is needed.
    """
    N, H = weight.shape
    Np = _round_up(N, 128)
    w_t = weight.T  # [H, N] so the kernel computes x @ W
    if Np != N:
        w_t = jnp.pad(w_t, ((0, 0), (0, Np - N)))
        bias = jnp.pad(bias, (0, Np - N))
    return w_t, bias.reshape(1, Np), N


def slot_classifier(x, w_padded, b_padded, num_labels, *, tm_max=1024):
    """x: [B, S, H]; w_padded: [H, Np]; b_padded: [1, Np]. Returns [B, S, num_labels]."""
    B, S, H = x.shape
    Np = w_padded.shape[1]
    M = B * S
    x2d = x.reshape(M, H)  # view-level reshape, no extra HBM pass

    xb = x.dtype.itemsize
    wb = w_padded.dtype.itemsize
    ob = x.dtype.itemsize
    bb = b_padded.dtype.itemsize

    # Sublane packing for the activation dtype: f32 -> 8, bf16 -> 16, int8/fp8 -> 32.
    sub = {4: 8, 2: 16, 1: 32}.get(xb, 8)

    vmem_limit, tile_budget = _vmem_budget()

    TM = min(tm_max, _round_up(M, sub))

    # ---- Fast path: full-H resident weight, no K grid axis, no accumulator. ----
    tm = TM
    use_fast = False
    while True:
        if _tile_vmem_bytes(tm, H, Np, xb, wb, ob, bb, with_acc=False) <= tile_budget:
            use_fast = True
            break
        if tm == sub:
            break
        tm = _shrink(tm, sub)

    compiler_common = dict(vmem_limit_bytes=vmem_limit)

    if use_fast:
        grid = (pl.cdiv(M, tm),)  # partial last block is masked; no jnp.pad of x
        out2d = pl.pallas_call(
            _slot_kernel_fused,
            out_shape=jax.ShapeDtypeStruct((M, Np), x.dtype),
            grid=grid,
            in_specs=[
                pl.BlockSpec((tm, H), lambda i: (i, 0)),    # x row tile
                pl.BlockSpec((H, Np), lambda i: (0, 0)),    # weight: resident, DMAed once
                pl.BlockSpec((1, Np), lambda i: (0, 0)),    # bias: resident
            ],
            out_specs=pl.BlockSpec((tm, Np), lambda i: (i, 0)),
            compiler_params=pltpu.CompilerParams(
                dimension_semantics=("parallel",), **compiler_common
            ),
        )(x2d, w_padded, b_padded)
        return out2d[:, :num_labels].reshape(B, S, num_labels)

    # ---- Fallback: K-tiled reduction for very large H (weight can't sit in VMEM). ----
    tk = None
    tm = sub
    for cand in (2048, 1024, 512, 256, 128):  # largest TK first: fewer acc RMW steps
        if H % cand == 0:
            t = TM
            while True:
                if _tile_vmem_bytes(t, cand, Np, xb, wb, ob, bb, with_acc=True) <= tile_budget:
                    tk, tm = cand, t
                    break
                if t == sub:
                    break
                t = _shrink(t, sub)
            if tk is not None:
                break

    if tk is None:
        # Last resort (H not a multiple of 128 and enormous): full-H block at the
        # minimum row tile via the fused kernel; may rely on compiler spilling.
        tm = sub
        grid = (pl.cdiv(M, tm),)
        out2d = pl.pallas_call(
            _slot_kernel_fused,
            out_shape=jax.ShapeDtypeStruct((M, Np), x.dtype),
            grid=grid,
            in_specs=[
                pl.BlockSpec((tm, H), lambda i: (i, 0)),
                pl.BlockSpec((H, Np), lambda i: (0, 0)),
                pl.BlockSpec((1, Np), lambda i: (0, 0)),
            ],
            out_specs=pl.BlockSpec((tm, Np), lambda i: (i, 0)),
            compiler_params=pltpu.CompilerParams(
                dimension_semantics=("parallel",), **compiler_common
            ),
        )(x2d, w_padded, b_padded)
        return out2d[:, :num_labels].reshape(B, S, num_labels)

    grid = (pl.cdiv(M, tm), H // tk)
    out2d = pl.pallas_call(
        _slot_kernel_ktiled,
        out_shape=jax.ShapeDtypeStruct((M, Np), x.dtype),
        grid=grid,
        in_specs=[
            pl.BlockSpec((tm, tk), lambda i, k: (i, k)),   # x row/K tile
            pl.BlockSpec((tk, Np), lambda i, k: (k, 0)),   # weight K tile
            pl.BlockSpec((1, Np), lambda i, k: (0, 0)),    # bias, resident
        ],
        out_specs=pl.BlockSpec((tm, Np), lambda i, k: (i, 0)),
        scratch_shapes=[pltpu.VMEM((tm, Np), jnp.float32)],
        compiler_params=pltpu.CompilerParams(
            dimension_semantics=("parallel", "arbitrary"), **compiler_common
        ),
    )(x2d, w_padded, b_padded)

    return out2d[:, :num_labels].reshape(B, S, num_labels)


if __name__ == "__main__":
    # Small shapes consistent with the module: batch=2, seq=8, hidden=32, labels=16.
    B, S, H, N = 2, 8, 32, 16

    key = jax.random.PRNGKey(0)
    kx, kw, kb = jax.random.split(key, 3)

    x = jax.random.normal(kx, (B, S, H), dtype=jnp.float32)

    # Deterministic parameter init mimicking nn.Linear: U(-1/sqrt(H), 1/sqrt(H)).
    bound = 1.0 / (H ** 0.5)
    weight = jax.random.uniform(kw, (N, H), dtype=jnp.float32,
                                minval=-bound, maxval=bound)  # PyTorch layout [N, H]
    bias = jax.random.uniform(kb, (N,), dtype=jnp.float32,
                              minval=-bound, maxval=bound)

    # Init-time prep (done once, not per forward).
    w_padded, b_padded, num_labels = prepare_slot_classifier_params(weight, bias)

    out = slot_classifier(x, w_padded, b_padded, num_labels)
    out = jax.block_until_ready(out)

    # Reference check against plain JAX (same semantics as the PyTorch forward,
    # with dropout rate 0.0 == identity).
    ref = x @ weight.T + bias
    assert out.shape == (B, S, N)
    assert jnp.allclose(out, ref, atol=1e-5, rtol=1e-5)

    print("KERNEL_OK")
</pallas_src>

<mosaic_0001>
module attributes {stable_mosaic.version = 11 : i64} {
  func.func @_slot_kernel_fused(%arg0: i32, %arg1: memref<16x32xf32, #tpu.memory_space<vmem>>, %arg2: memref<32x128xf32, #tpu.memory_space<vmem>>, %arg3: memref<1x128xf32, #tpu.memory_space<vmem>>, %arg4: memref<16x128xf32, #tpu.memory_space<vmem>>) attributes {dimension_semantics = [#tpu.dimension_semantics<parallel>], iteration_bounds = array<i64: 1>, scalar_prefetch = 0 : i64, scratch_operands = 0 : i64, tpu.core_type = #tpu.core_type<tc>, window_params = [{transform_indices = @transform_0, window_bounds = array<i64: 16, 32>}, {pipeline_mode = #tpu.pipeline_mode<synchronous>, transform_indices = @transform_1, window_bounds = array<i64: 32, 128>}, {pipeline_mode = #tpu.pipeline_mode<synchronous>, transform_indices = @transform_2, window_bounds = array<i64: 1, 128>}, {transform_indices = @transform_3, window_bounds = array<i64: 16, 128>}]} {
    %c0 = arith.constant 0 : index
    %c0_0 = arith.constant 0 : index
    %0 = vector.load %arg1[%c0, %c0_0] : memref<16x32xf32, #tpu.memory_space<vmem>>, vector<16x32xf32>
    %c0_1 = arith.constant 0 : index
    %c0_2 = arith.constant 0 : index
    %1 = vector.load %arg2[%c0_1, %c0_2] : memref<32x128xf32, #tpu.memory_space<vmem>>, vector<32x128xf32>
    %cst = arith.constant dense<0.000000e+00> : vector<16x128xf32>
    %2 = tpu.matmul %0, %1, %cst {dimension_numbers = #tpu.dot_dimension_numbers<[1], [0], [0], [1], [0, 0, 1, 1], [], []>} : vector<16x32xf32>, vector<32x128xf32>, vector<16x128xf32> -> vector<16x128xf32>
    %c0_3 = arith.constant 0 : index
    %c0_4 = arith.constant 0 : index
    %3 = vector.load %arg3[%c0_3, %c0_4] : memref<1x128xf32, #tpu.memory_space<vmem>>, vector<1x128xf32>
    %4 = vector.broadcast %3 : vector<1x128xf32> to vector<16x128xf32>
    %5 = arith.addf %2, %4 : vector<16x128xf32>
    %c0_5 = arith.constant 0 : index
    %c0_6 = arith.constant 0 : index
    %6 = vector.load %arg4[%c0_5, %c0_6] : memref<16x128xf32, #tpu.memory_space<vmem>>, vector<16x128xf32>
    tpu.vector_store %arg4[%c0_5, %c0_6], %5 {strides = array<i32>} : memref<16x128xf32, #tpu.memory_space<vmem>>, vector<16x128xf32>,
    return
  }
  func.func @transform_0(%arg0: i32) -> (i32, i32) {
    %c0_i32 = arith.constant 0 : i32
    %c0_i32_0 = arith.constant 0 : i32
    return %arg0, %c0_i32 : i32, i32
  }
  func.func @transform_1(%arg0: i32) -> (i32, i32) {
    %c0_i32 = arith.constant 0 : i32
    %c0_i32_0 = arith.constant 0 : i32
    %c0_i32_1 = arith.constant 0 : i32
    return %c0_i32, %c0_i32_0 : i32, i32
  }
  func.func @transform_2(%arg0: i32) -> (i32, i32) {
    %c0_i32 = arith.constant 0 : i32
    %c0_i32_0 = arith.constant 0 : i32
    %c0_i32_1 = arith.constant 0 : i32
    return %c0_i32, %c0_i32_0 : i32, i32
  }
  func.func @transform_3(%arg0: i32) -> (i32, i32) {
    %c0_i32 = arith.constant 0 : i32
    %c0_i32_0 = arith.constant 0 : i32
    return %arg0, %c0_i32 : i32, i32
  }
}

</mosaic_0001>

<llo_original>
// kernel: tpu_custom_call.1
$region0: #{tpu_custom_call.1}
  #allocation0 [shape = 'u32[]', space=smem, size = 0x4, offset = 0x4, fixed_abs, tag = 'smem constant byte address 0x4 - core index']
  #allocation1 [shape = 'u32[144,128]{1,0:T(1,128)}', space=vmem, size = 0x12000, scoped, tag = 'internal scratch']
  %s0 = inlined_call_operand.hbm [shape: f32[16,32], index: 0, kind: input, shape index: {}]
  %s1 = inlined_call_operand.hbm [shape: f32[32,128], index: 1, kind: input, shape index: {}]
  %s2 = inlined_call_operand.vmem [shape: f32[1,128], index: 2, kind: input, shape index: {}]
  %s3 = inlined_call_operand.hbm [shape: f32[16,128], index: 3, kind: output, shape index: {}]
  %s4 = sld [smem:[#allocation0]]
  $region30: #{tpu_custom_call.1} parent=0
    _
  %s6 = ssub.s32 1, %s4
  %s7 = scalar_select 0, %s6, %s4
  $region1: #{tpu_custom_call.1} parent=0
    #allocation2 [shape = 'u8[8192]{0}', space=vmem, size = 0x2000, scoped, tag = 'input window, operand 0, single buffered']
    #allocation3 [shape = 's32[1]{0}', space=sflag, size = 0x4, scoped, tag = 'scoped memory for tpu_custom_call.1']
    #allocation4 [shape = 's32[1]{0}', space=sflag, size = 0x4, scoped, tag = 'scoped memory for tpu_custom_call.1']
    #allocation5 [shape = 'u8[16384]{0}', space=vmem, size = 0x4000, scoped, tag = 'input window, operand 1, single buffered']
    #allocation6 [shape = 's32[1]{0}', space=sflag, size = 0x4, scoped, tag = 'scoped memory for tpu_custom_call.1']
    #allocation7 [shape = 'u8[8192]{0}', space=vmem, size = 0x2000, scoped, tag = 'output window, operand 0, single buffered']
    %8 = vsyncpa [#allocation3], 0
    %9 = vsyncpa [#allocation6], 0
    %10 = vsyncpa [#allocation4], 0
    // Predicated region
    $region2: #{tpu_custom_call.1} parent=1 // pred_check
      _
    $region3: #{tpu_custom_call.1} parent=1 // pred_check_branch
      %12 = sbr.rel (0) target = $region5
    $region4: #{tpu_custom_call.1} parent=1 // pred_region
      %s14 = ssub.s32 256, 256
      %15 = vsyncadd [#allocation3], %s14
      %s16 = sshll.u32 [#allocation2], 4
      %s17 = int_to_ptr.vmem [resolvable:$true] %s16
      %22 = dma.hbm_to_vmem [thread:$0]  %s0, 256, %s17, [#allocation3], 128, 128, 8
    $region5: #{tpu_custom_call.1} parent=1 // pred_fallthru
      _
    // Predicated region
    $region6: #{tpu_custom_call.1} parent=1 // pred_check
      _
    $region7: #{tpu_custom_call.1} parent=1 // pred_check_branch
      %24 = sbr.rel (0) target = $region9
    $region8: #{tpu_custom_call.1} parent=1 // pred_region
      %s26 = ssub.s32 512, 512
      %27 = vsyncadd [#allocation6], %s26
      %s28 = sshll.u32 [#allocation5], 4
      %s29 = int_to_ptr.vmem [resolvable:$true] %s28
      %34 = dma.hbm_to_vmem [thread:$0]  %s1, 512, %s29, [#allocation6], 128, 128, 8
    $region9: #{tpu_custom_call.1} parent=1 // pred_fallthru
      _
    // Predicated region
    $region10: #{tpu_custom_call.1} parent=1 // pred_check
      _
    $region11: #{tpu_custom_call.1} parent=1 // pred_check_branch
      %36 = sbr.rel (0) target = $region13
    $region12: #{tpu_custom_call.1} parent=1 // pred_region
      _
    $region13: #{tpu_custom_call.1} parent=1 // pred_fallthru
      _
    // Predicated region
    $region14: #{tpu_custom_call.1} parent=1 // pred_check
      _
    $region15: #{tpu_custom_call.1} parent=1 // pred_check_branch
      %38 = sbr.rel (0) target = $region17
    $region16: #{tpu_custom_call.1} parent=1 // pred_region
      %39 = dma.done [#allocation3], 256
    $region17: #{tpu_custom_call.1} parent=1 // pred_fallthru
      _
    // Predicated region
    $region18: #{tpu_custom_call.1} parent=1 // pred_check
      _
    $region19: #{tpu_custom_call.1} parent=1 // pred_check_branch
      %41 = sbr.rel (0) target = $region21
    $region20: #{tpu_custom_call.1} parent=1 // pred_region
      %42 = dma.done [#allocation6], 512
    $region21: #{tpu_custom_call.1} parent=1 // pred_fallthru
      _
    %v43 = vld [vmem:[#allocation2] sm:$0xff]
    %v44 = vld [vmem:[#allocation2 + $0x8] sm:$0xff]
    %v45 = vld [vmem:[#allocation5] sm:$0xff]
    %v46 = vld [vmem:[#allocation5 + $0x8] sm:$0xff]
    %v47 = vld [vmem:[#allocation5 + $0x10] sm:$0xff]
    %v48 = vld [vmem:[#allocation5 + $0x18] sm:$0xff]
    %v49 = vld [vmem:[%s2] sm:$0x1]
    %v51 = vlaneseq
    %v52 = vshrl.u32 %v51, 7
    %v53 = vsub.s32 0, %v52
    %v54 = vrot.slane %v49, %v53
    %vm56 = vcmask 261120
    %v58 = vsel %vm56, %v43, 0
    %v61 = vsel %vm56, %v44, 0
    %63 = vmatprep.subr.mxu0 0.0
    %64 = vmatpush1.msra.mxu0 0.0
    %65 = vmatprep.subr.mxu0 0.0
    %66 = vmatpush1.msra.mxu0 0.0
    %67 = vmatprep.subr.mxu0 0.0
    %68 = vmatpush1.msra.mxu0 0.0
    %69 = vmatprep.subr.mxu0 0.0
    %70 = vmatpush1.msra.mxu0 0.0
    %71 = vmatprep.subr.mxu0 0.0
    %72 = vmatpush1.msra.mxu0 0.0
    %73 = vmatprep.subr.mxu0 0.0
    %74 = vmatpush1.msra.mxu0 0.0
    %75 = vmatprep.subr.mxu0 0.0
    %76 = vmatpush1.msra.mxu0 0.0
    %77 = vmatprep.subr.mxu0 0.0
    %78 = vmatpush1.msra.mxu0 0.0
    %79 = vmatprep.subr.mxu0 0.0
    %80 = vmatpush1.msra.mxu0 0.0
    %81 = vmatprep.subr.mxu0 0.0
    %82 = vmatpush1.msra.mxu0 0.0
    %83 = vmatprep.subr.mxu0 0.0
    %84 = vmatpush1.msra.mxu0 0.0
    %85 = vmatprep.subr.mxu0 0.0
    %86 = vmatpush1.msra.mxu0 0.0
    %87 = vmatprep.subr.mxu0 0.0
    %88 = vmatpush1.msra.mxu0 %v48
    %89 = vmatprep.subr.mxu0 0.0
    %90 = vmatpush1.msra.mxu0 %v47
    %91 = vmatprep.subr.mxu0 0.0
    %92 = vmatpush1.msra.mxu0 %v46
    %93 = vmatprep.subr.mxu0 0.0
    %94 = vmatpush1.msra.mxu0 %v45
    %95 = vmatprep.subr.mxu0 0.0
    %96 = vmatpush2.msra.mxu0 0.0
    %97 = vmatprep.subr.mxu0 0.0
    %98 = vmatpush2.msra.mxu0 0.0
    %99 = vmatprep.subr.mxu0 0.0
    %100 = vmatpush2.msra.mxu0 0.0
    %101 = vmatprep.subr.mxu0 0.0
    %102 = vmatpush2.msra.mxu0 0.0
    %103 = vmatprep.subr.mxu0 0.0
    %104 = vmatpush2.msra.mxu0 0.0
    %105 = vmatprep.subr.mxu0 0.0
    %106 = vmatpush2.msra.mxu0 0.0
    %107 = vmatprep.subr.mxu0 0.0
    %108 = vmatpush2.msra.mxu0 0.0
    %109 = vmatprep.subr.mxu0 0.0
    %110 = vmatpush2.msra.mxu0 0.0
    %111 = vmatprep.subr.mxu0 0.0
    %112 = vmatpush2.msra.mxu0 0.0
    %113 = vmatprep.subr.mxu0 0.0
    %114 = vmatpush2.msra.mxu0 0.0
    %115 = vmatprep.subr.mxu0 0.0
    %116 = vmatpush2.msra.mxu0 0.0
    %117 = vmatprep.subr.mxu0 0.0
    %118 = vmatpush2.msra.mxu0 0.0
    %119 = vmatprep.subr.mxu0 0.0
    %120 = vmatpush2.msra.mxu0 0.0
    %121 = vmatprep.subr.mxu0 0.0
    %122 = vmatpush2.msra.mxu0 0.0
    %123 = vmatprep.subr.mxu0 0.0
    %124 = vmatpush2.msra.mxu0 0.0
    %125 = vmatprep.subr.mxu0 0.0
    %126 = vmatpush2.msra.mxu0 0.0
    %127 = vmatprep.mubr.f32.mxu0 0.0
    %128 = vmatmul.mubr.f32.gmra.mxu0 %v58
    %v129 = vpop.f32.mrf.mxu0
    %v130 = vadd.f32 %v54, %v129
    %v131 = vpop.f32.mrf.mxu0
    %132 = vmatprep.mubr.f32.mxu0 0.0
    %133 = vmatmul.mubr.f32.gmra.mxu0 %v61
    %v134 = vpop.f32.mrf.mxu0
    %v135 = vadd.f32 %v54, %v134
    %v136 = vpop.f32.mrf.mxu0
    %137 = vdwg.mxu0
    %138 = vst [vmem:[#allocation7] sm:$0xff] %v130
    %139 = vst [vmem:[#allocation7 + $0x8] sm:$0xff] %v135
    // Predicated region
    $region22: #{tpu_custom_call.1} parent=1 // pred_check
      _
    $region23: #{tpu_custom_call.1} parent=1 // pred_check_branch
      %141 = sbr.rel (0) target = $region25
    $region24: #{tpu_custom_call.1} parent=1 // pred_region
      %s143 = ssub.s32 256, 256
      %144 = vsyncadd [#allocation4], %s143
      %s145 = sshll.u32 [#allocation7], 4
      %s146 = int_to_ptr.vmem [resolvable:$true] %s145
      %151 = dma.vmem_to_hbm [thread:$0]  %s146, 256, %s3, [#allocation4], 128, 128, 8
    $region25: #{tpu_custom_call.1} parent=1 // pred_fallthru
      _
    // Predicated region
    $region26: #{tpu_custom_call.1} parent=1 // pred_check
      _
    $region27: #{tpu_custom_call.1} parent=1 // pred_check_branch
      %153 = sbr.rel (0) target = $region29
    $region28: #{tpu_custom_call.1} parent=1 // pred_region
      %154 = dma.done [#allocation4], 256
    $region29: #{tpu_custom_call.1} parent=1 // pred_fallthru
      _
    %155 = vsyncpa [#allocation3], 1
    %156 = vsyncpa [#allocation6], 1
    %157 = vsyncpa [#allocation4], 1

</llo_original>
